<compile_context>
chip_gen: v5e
topology: v5e:2x2
jax: 0.10.0
libtpu: 0.0.40
codegen_flags: <defaults>
</compile_context>

<pallas_src>
import jax
import jax.numpy as jnp
from jax import lax
from jax.experimental import pallas as pl
from jax.experimental.pallas import tpu as pltpu


def value_kernel(x_ref, w1_ref, b1_ref, w2_ref, b2_ref, w3_ref, b3_ref, o_ref):
    # x_ref : (TB, D) f32   -- natural (batch, feature) layout, cast in-kernel
    # w1_ref: (H, D)  bf16, b1_ref: (H, 1) f32
    # w2_ref: (H, H)  bf16, b2_ref: (H, 1) f32
    # w3_ref: (H, 1)  f32,  b3_ref: (1, 1) f32 in SMEM
    # o_ref : (1, TB) f32   -- lane-dense output row (batch on lanes)
    x_bf = x_ref[...].astype(jnp.bfloat16)                               # (TB, D)

    # l1 + relu: contract on D, keep batch on lanes -> (H, TB), f32 accumulate.
    h = lax.dot_general(w1_ref[...], x_bf,
                        dimension_numbers=(((1,), (1,)), ((), ())),
                        preferred_element_type=jnp.float32)              # (H, TB)
    h = jnp.maximum(h + b1_ref[...], 0.0)

    # l2 + relu (MXU, bf16 inputs, f32 accumulate).
    h = jnp.dot(w2_ref[...], h.astype(jnp.bfloat16),
                preferred_element_type=jnp.float32)                      # (H, TB)
    h = jnp.maximum(h + b2_ref[...], 0.0)

    # l3 (out_features = 1): VPU multiply + XLU sublane reduce, not an MXU pass.
    v = jnp.sum(h * w3_ref[...], axis=0, keepdims=True) + b3_ref[0, 0]   # (1, TB)
    o_ref[...] = v.astype(o_ref.dtype)


def _pick_tb(batch):
    # Single grid step for anything up to 4096 rows (block == full array dims);
    # otherwise stream 4096-wide 128-multiple tiles (sweep 2048-4096 per chip;
    # Pallas masks the partial last tile).
    if batch <= 4096:
        return batch
    return 4096


def value_forward(state, kparams):
    """state: (B, state_dim) f32, kparams from prepare_value_params -> (B,) f32."""
    w1_bf, b1, w2_bf, b2, w3, b3 = kparams
    B, D = state.shape
    H = w1_bf.shape[0]

    TB = _pick_tb(B)
    grid = (pl.cdiv(B, TB),)

    out = pl.pallas_call(
        value_kernel,
        out_shape=jax.ShapeDtypeStruct((1, B), jnp.float32),
        grid=grid,
        in_specs=[
            pl.BlockSpec((TB, D), lambda i: (i, 0)),   # state tile (streamed, f32)
            pl.BlockSpec((H, D), lambda i: (0, 0)),    # w1 (VMEM-resident)
            pl.BlockSpec((H, 1), lambda i: (0, 0)),    # b1 (resident)
            pl.BlockSpec((H, H), lambda i: (0, 0)),    # w2 (resident)
            pl.BlockSpec((H, 1), lambda i: (0, 0)),    # b2 (resident)
            pl.BlockSpec((H, 1), lambda i: (0, 0)),    # w3 (resident)
            pl.BlockSpec(memory_space=pltpu.SMEM),     # b3 scalar in SMEM
        ],
        out_specs=pl.BlockSpec((1, TB), lambda i: (0, i)),
        compiler_params=pltpu.CompilerParams(
            dimension_semantics=("parallel",),
            vmem_limit_bytes=32 * 1024 * 1024,
        ),
    )(state, w1_bf, b1, w2_bf, b2, w3, b3)

    # torch.squeeze(v, dim=-1): wrapper-side layout plumbing only.
    return out.reshape(B)


def init_value_params(key, state_dim, hidden_size=256):
    """PyTorch nn.Linear layout + init (U[-1/sqrt(fan_in), 1/sqrt(fan_in)]), f32."""
    ks = jax.random.split(key, 6)

    def uni(k, shape, fan_in):
        bound = 1.0 / jnp.sqrt(jnp.float32(fan_in))
        return jax.random.uniform(k, shape, jnp.float32, -bound, bound)

    w1 = uni(ks[0], (hidden_size, state_dim), state_dim)
    b1 = uni(ks[1], (hidden_size,), state_dim)
    w2 = uni(ks[2], (hidden_size, hidden_size), hidden_size)
    b2 = uni(ks[3], (hidden_size,), hidden_size)
    w3 = uni(ks[4], (1, hidden_size), hidden_size)
    b3 = uni(ks[5], (1,), hidden_size)
    return (w1, b1, w2, b2, w3, b3)


def prepare_value_params(params):
    """One-time conversion to the kernel's layout/dtypes.  Call this OUTSIDE the
    per-step loop (hoisted weight cast from the perf review)."""
    w1, b1, w2, b2, w3, b3 = params
    return (
        w1.astype(jnp.bfloat16),                 # (H, D)  bf16
        b1.reshape(-1, 1).astype(jnp.float32),   # (H, 1)  f32
        w2.astype(jnp.bfloat16),                 # (H, H)  bf16
        b2.reshape(-1, 1).astype(jnp.float32),   # (H, 1)  f32
        w3.reshape(-1, 1).astype(jnp.float32),   # (H, 1)  f32 (column for VPU reduce)
        b3.reshape(1, 1).astype(jnp.float32),    # (1, 1)  f32 (SMEM scalar)
    )


def value_ref(state, params):
    """Pure-JAX reference mirroring the kernel's numerics (bf16 matmul inputs,
    f32 accumulation)."""
    w1, b1, w2, b2, w3, b3 = params
    x = state.astype(jnp.bfloat16)
    h = jnp.dot(x, w1.T.astype(jnp.bfloat16),
                preferred_element_type=jnp.float32) + b1
    h = jnp.maximum(h, 0.0)
    h = jnp.dot(h.astype(jnp.bfloat16), w2.T.astype(jnp.bfloat16),
                preferred_element_type=jnp.float32) + b2
    h = jnp.maximum(h, 0.0)
    v = h @ w3.T + b3                               # (B, 1)
    return jnp.squeeze(v, axis=-1)


if __name__ == "__main__":
    key = jax.random.PRNGKey(0)
    k_x, k_p = jax.random.split(key)

    batch, state_dim, hidden = 8, 16, 32
    state = jax.random.normal(k_x, (batch, state_dim), jnp.float32)
    params = init_value_params(k_p, state_dim, hidden)
    kparams = prepare_value_params(params)   # one-time layout/dtype conversion

    out = value_forward(state, kparams)
    out = jax.block_until_ready(out)

    ref = value_ref(state, params)
    assert out.shape == (batch,), out.shape
    assert jnp.allclose(out, ref, atol=1e-3, rtol=1e-3), (out, ref)

    print("KERNEL_OK")
</pallas_src>

<mosaic_0001>
module attributes {stable_mosaic.version = 11 : i64} {
  func.func @value_kernel(%arg0: i32, %arg1: memref<8x16xf32, #tpu.memory_space<vmem>>, %arg2: memref<32x16xbf16, #tpu.memory_space<vmem>>, %arg3: memref<32x1xf32, #tpu.memory_space<vmem>>, %arg4: memref<32x32xbf16, #tpu.memory_space<vmem>>, %arg5: memref<32x1xf32, #tpu.memory_space<vmem>>, %arg6: memref<32x1xf32, #tpu.memory_space<vmem>>, %arg7: memref<1x1xf32, #tpu.memory_space<smem>>, %arg8: memref<1x8xf32, #tpu.memory_space<vmem>>) attributes {dimension_semantics = [#tpu.dimension_semantics<parallel>], iteration_bounds = array<i64: 1>, scalar_prefetch = 0 : i64, scratch_operands = 0 : i64, tpu.core_type = #tpu.core_type<tc>, window_params = [{transform_indices = @transform_0, window_bounds = array<i64: 8, 16>}, {pipeline_mode = #tpu.pipeline_mode<synchronous>, transform_indices = @transform_1, window_bounds = array<i64: 32, 16>}, {pipeline_mode = #tpu.pipeline_mode<synchronous>, transform_indices = @transform_2, window_bounds = array<i64: 32, 1>}, {pipeline_mode = #tpu.pipeline_mode<synchronous>, transform_indices = @transform_3, window_bounds = array<i64: 32, 32>}, {pipeline_mode = #tpu.pipeline_mode<synchronous>, transform_indices = @transform_4, window_bounds = array<i64: 32, 1>}, {pipeline_mode = #tpu.pipeline_mode<synchronous>, transform_indices = @transform_5, window_bounds = array<i64: 32, 1>}, {transform_indices = @transform_6, window_bounds = array<i64: 1, 1>}, {transform_indices = @transform_7, window_bounds = array<i64: 1, 8>}]} {
    %c0 = arith.constant 0 : index
    %c0_0 = arith.constant 0 : index
    %0 = vector.load %arg1[%c0, %c0_0] : memref<8x16xf32, #tpu.memory_space<vmem>>, vector<8x16xf32>
    %1 = arith.truncf %0 : vector<8x16xf32> to vector<8x16xbf16>
    %c0_1 = arith.constant 0 : index
    %c0_2 = arith.constant 0 : index
    %2 = vector.load %arg2[%c0_1, %c0_2] : memref<32x16xbf16, #tpu.memory_space<vmem>>, vector<32x16xbf16>
    %cst = arith.constant dense<0.000000e+00> : vector<32x8xf32>
    %3 = tpu.matmul %2, %1, %cst {dimension_numbers = #tpu.dot_dimension_numbers<[1], [1], [0], [0], [0, 0, 1, 0], [], []>} : vector<32x16xbf16>, vector<8x16xbf16>, vector<32x8xf32> -> vector<32x8xf32>
    %c0_3 = arith.constant 0 : index
    %c0_4 = arith.constant 0 : index
    %4 = vector.load %arg3[%c0_3, %c0_4] : memref<32x1xf32, #tpu.memory_space<vmem>>, vector<32x1xf32>
    %5 = vector.broadcast %4 : vector<32x1xf32> to vector<32x8xf32>
    %6 = arith.addf %3, %5 : vector<32x8xf32>
    %cst_5 = arith.constant 0.000000e+00 : f32
    %7 = vector.broadcast %cst_5 : f32 to vector<32x8xf32>
    %8 = arith.maximumf %6, %7 : vector<32x8xf32>
    %c0_6 = arith.constant 0 : index
    %c0_7 = arith.constant 0 : index
    %9 = vector.load %arg4[%c0_6, %c0_7] : memref<32x32xbf16, #tpu.memory_space<vmem>>, vector<32x32xbf16>
    %10 = arith.truncf %8 : vector<32x8xf32> to vector<32x8xbf16>
    %cst_8 = arith.constant dense<0.000000e+00> : vector<32x8xf32>
    %11 = tpu.matmul %9, %10, %cst_8 {dimension_numbers = #tpu.dot_dimension_numbers<[1], [0], [0], [1], [0, 0, 1, 1], [], []>} : vector<32x32xbf16>, vector<32x8xbf16>, vector<32x8xf32> -> vector<32x8xf32>
    %c0_9 = arith.constant 0 : index
    %c0_10 = arith.constant 0 : index
    %12 = vector.load %arg5[%c0_9, %c0_10] : memref<32x1xf32, #tpu.memory_space<vmem>>, vector<32x1xf32>
    %13 = vector.broadcast %12 : vector<32x1xf32> to vector<32x8xf32>
    %14 = arith.addf %11, %13 : vector<32x8xf32>
    %cst_11 = arith.constant 0.000000e+00 : f32
    %15 = vector.broadcast %cst_11 : f32 to vector<32x8xf32>
    %16 = arith.maximumf %14, %15 : vector<32x8xf32>
    %c0_12 = arith.constant 0 : index
    %c0_13 = arith.constant 0 : index
    %17 = vector.load %arg6[%c0_12, %c0_13] : memref<32x1xf32, #tpu.memory_space<vmem>>, vector<32x1xf32>
    %18 = vector.broadcast %17 : vector<32x1xf32> to vector<32x8xf32>
    %19 = arith.mulf %16, %18 : vector<32x8xf32>
    %cst_14 = arith.constant dense<0.000000e+00> : vector<8xf32>
    %20 = vector.multi_reduction <add>, %19, %cst_14 [0] : vector<32x8xf32> to vector<8xf32>
    %21 = vector.shape_cast %20 : vector<8xf32> to vector<1x8xf32>
    %c0_15 = arith.constant 0 : index
    %c0_16 = arith.constant 0 : index
    %22 = memref.load %arg7[%c0_15, %c0_16] : memref<1x1xf32, #tpu.memory_space<smem>>
    %23 = vector.broadcast %22 : f32 to vector<1x8xf32>
    %24 = arith.addf %21, %23 : vector<1x8xf32>
    %c0_17 = arith.constant 0 : index
    %c0_18 = arith.constant 0 : index
    %25 = vector.load %arg8[%c0_17, %c0_18] : memref<1x8xf32, #tpu.memory_space<vmem>>, vector<1x8xf32>
    tpu.vector_store %arg8[%c0_17, %c0_18], %24 {strides = array<i32>} : memref<1x8xf32, #tpu.memory_space<vmem>>, vector<1x8xf32>,
    return
  }
  func.func @transform_0(%arg0: i32) -> (i32, i32) {
    %c0_i32 = arith.constant 0 : i32
    %c0_i32_0 = arith.constant 0 : i32
    return %arg0, %c0_i32 : i32, i32
  }
  func.func @transform_1(%arg0: i32) -> (i32, i32) {
    %c0_i32 = arith.constant 0 : i32
    %c0_i32_0 = arith.constant 0 : i32
    %c0_i32_1 = arith.constant 0 : i32
    return %c0_i32, %c0_i32_0 : i32, i32
  }
  func.func @transform_2(%arg0: i32) -> (i32, i32) {
    %c0_i32 = arith.constant 0 : i32
    %c0_i32_0 = arith.constant 0 : i32
    %c0_i32_1 = arith.constant 0 : i32
    return %c0_i32, %c0_i32_0 : i32, i32
  }
  func.func @transform_3(%arg0: i32) -> (i32, i32) {
    %c0_i32 = arith.constant 0 : i32
    %c0_i32_0 = arith.constant 0 : i32
    %c0_i32_1 = arith.constant 0 : i32
    return %c0_i32, %c0_i32_0 : i32, i32
  }
  func.func @transform_4(%arg0: i32) -> (i32, i32) {
    %c0_i32 = arith.constant 0 : i32
    %c0_i32_0 = arith.constant 0 : i32
    %c0_i32_1 = arith.constant 0 : i32
    return %c0_i32, %c0_i32_0 : i32, i32
  }
  func.func @transform_5(%arg0: i32) -> (i32, i32) {
    %c0_i32 = arith.constant 0 : i32
    %c0_i32_0 = arith.constant 0 : i32
    %c0_i32_1 = arith.constant 0 : i32
    return %c0_i32, %c0_i32_0 : i32, i32
  }
  func.func @transform_6(%arg0: i32) -> (i32, i32) {
    %c0_i32 = arith.constant 0 : i32
    %c0_i32_0 = arith.constant 0 : i32
    %c0_i32_1 = arith.constant 0 : i32
    return %c0_i32, %c0_i32_0 : i32, i32
  }
  func.func @transform_7(%arg0: i32) -> (i32, i32) {
    %c0_i32 = arith.constant 0 : i32
    %c0_i32_0 = arith.constant 0 : i32
    return %c0_i32, %arg0 : i32, i32
  }
}

</mosaic_0001>

<llo_original>
// kernel: tpu_custom_call.1
$region0: #{tpu_custom_call.1}
  #allocation0 [shape = 'u32[]', space=smem, size = 0x4, offset = 0x4, fixed_abs, tag = 'smem constant byte address 0x4 - core index']
  #allocation1 [shape = 'u32[72,128]{1,0:T(1,128)}', space=vmem, size = 0x9000, scoped, tag = 'internal scratch']
  #allocation2 [shape = 'f32[1,1]{1,0:T(1,128)S(6)}', space=smem, size = 0x200, scoped, tag = 'scoped memory for tpu_custom_call.1']
  %s0 = inlined_call_operand.vmem [shape: f32[8,16], index: 0, kind: input, shape index: {}]
  %s1 = inlined_call_operand.vmem [shape: bf16[32,16], index: 1, kind: input, shape index: {}]
  %s2 = inlined_call_operand.vmem [shape: f32[32,1], index: 2, kind: input, shape index: {}]
  %s3 = inlined_call_operand.vmem [shape: bf16[32,32], index: 3, kind: input, shape index: {}]
  %s4 = inlined_call_operand.vmem [shape: f32[32,1], index: 4, kind: input, shape index: {}]
  %s5 = inlined_call_operand.vmem [shape: f32[32,1], index: 5, kind: input, shape index: {}]
  %s6 = inlined_call_operand.<no memory space> [shape: f32[1,1], index: 6, kind: input, shape index: {}]
  %s7 = inlined_call_operand.hbm [shape: f32[1,8], index: 7, kind: output, shape index: {}]
  %s8 = sld [smem:[#allocation0]]
  $region38: #{tpu_custom_call.1} parent=0
    _
  %s10 = ssub.s32 1, %s8
  %s11 = scalar_select 0, %s10, %s8
  %12 = sst [smem:[#allocation2]] %s6
  $region1: #{tpu_custom_call.1} parent=0
    #allocation3 [shape = 'u8[512]{0}', space=vmem, size = 0x400, scoped, tag = 'output window, operand 0, single buffered']
    #allocation4 [shape = 's32[1]{0}', space=sflag, size = 0x4, scoped, tag = 'scoped memory for tpu_custom_call.1']
    %13 = vsyncpa [#allocation4], 0
    // Predicated region
    $region2: #{tpu_custom_call.1} parent=1 // pred_check
      _
    $region3: #{tpu_custom_call.1} parent=1 // pred_check_branch
      %15 = sbr.rel (0) target = $region5
    $region4: #{tpu_custom_call.1} parent=1 // pred_region
      _
    $region5: #{tpu_custom_call.1} parent=1 // pred_fallthru
      _
    // Predicated region
    $region6: #{tpu_custom_call.1} parent=1 // pred_check
      _
    $region7: #{tpu_custom_call.1} parent=1 // pred_check_branch
      %17 = sbr.rel (0) target = $region9
    $region8: #{tpu_custom_call.1} parent=1 // pred_region
      _
    $region9: #{tpu_custom_call.1} parent=1 // pred_fallthru
      _
    // Predicated region
    $region10: #{tpu_custom_call.1} parent=1 // pred_check
      _
    $region11: #{tpu_custom_call.1} parent=1 // pred_check_branch
      %19 = sbr.rel (0) target = $region13
    $region12: #{tpu_custom_call.1} parent=1 // pred_region
      _
    $region13: #{tpu_custom_call.1} parent=1 // pred_fallthru
      _
    // Predicated region
    $region14: #{tpu_custom_call.1} parent=1 // pred_check
      _
    $region15: #{tpu_custom_call.1} parent=1 // pred_check_branch
      %21 = sbr.rel (0) target = $region17
    $region16: #{tpu_custom_call.1} parent=1 // pred_region
      _
    $region17: #{tpu_custom_call.1} parent=1 // pred_fallthru
      _
    // Predicated region
    $region18: #{tpu_custom_call.1} parent=1 // pred_check
      _
    $region19: #{tpu_custom_call.1} parent=1 // pred_check_branch
      %23 = sbr.rel (0) target = $region21
    $region20: #{tpu_custom_call.1} parent=1 // pred_region
      _
    $region21: #{tpu_custom_call.1} parent=1 // pred_fallthru
      _
    // Predicated region
    $region22: #{tpu_custom_call.1} parent=1 // pred_check
      _
    $region23: #{tpu_custom_call.1} parent=1 // pred_check_branch
      %25 = sbr.rel (0) target = $region25
    $region24: #{tpu_custom_call.1} parent=1 // pred_region
      _
    $region25: #{tpu_custom_call.1} parent=1 // pred_fallthru
      _
    // Predicated region
    $region26: #{tpu_custom_call.1} parent=1 // pred_check
      _
    $region27: #{tpu_custom_call.1} parent=1 // pred_check_branch
      %27 = sbr.rel (0) target = $region29
    $region28: #{tpu_custom_call.1} parent=1 // pred_region
      _
    $region29: #{tpu_custom_call.1} parent=1 // pred_fallthru
      _
    %v29 = vld [vmem:[%s0] sm:$0xff]
    %v30 = vpack.c.bf16 %v29, %v29
    %v31 = vld [vmem:[%s1] sm:$0xf]
    %v32 = vld [vmem:[%s1 + $0x4] sm:$0xf]
    %v33 = vld [vmem:[%s1 + $0x8] sm:$0xf]
    %v34 = vld [vmem:[%s1 + $0xc] sm:$0xf]
    %v35 = vld [vmem:[%s2] sm:$0xff]
    %v36 = vld [vmem:[%s2 + $0x8] sm:$0xff]
    %v37 = vld [vmem:[%s2 + $0x10] sm:$0xff]
    %v38 = vld [vmem:[%s2 + $0x18] sm:$0xff]
    %40 = vset.pattern.permute.xlu0 0
    %41 = vperm.xlu0 %40, %v35
    %v42 = vpop.permute.xlu0 %41
    %45 = vset.pattern.permute.xlu0 0
    %46 = vperm.xlu0 %45, %v36
    %v47 = vpop.permute.xlu0 %46
    %50 = vset.pattern.permute.xlu0 0
    %51 = vperm.xlu0 %50, %v37
    %v52 = vpop.permute.xlu0 %51
    %55 = vset.pattern.permute.xlu0 0
    %56 = vperm.xlu0 %55, %v38
    %v57 = vpop.permute.xlu0 %56
    %v63 = vunpack.c.l.b16 %v31
    %v64 = vunpack.c.l.b16 %v32
    %v65 = vunpack.c.l.b16 %v33
    %v66 = vunpack.c.l.b16 %v34
    %v67 = vpack.c.b16 %v64, %v63
    %v68 = vpack.c.b16 %v66, %v65
    %vm69 = vcmask 130048
    %v71 = vsel %vm69, %v67, 0
    %v74 = vsel %vm69, %v68, 0
    %v77 = vsel %vm69, %v30, 0
    %79 = vmatpush.bf16.xpose.msra.mxu0 0
    %80 = vmatpush.bf16.xpose.msra.mxu0 0
    %81 = vmatpush.bf16.xpose.msra.mxu0 0
    %82 = vmatpush.bf16.xpose.msra.mxu0 0
    %83 = vmatpush.bf16.xpose.msra.mxu0 0
    %84 = vmatpush.bf16.xpose.msra.mxu0 0
    %85 = vmatpush.bf16.xpose.msra.mxu0 0
    %86 = vmatpush.bf16.xpose.msra.mxu0 %v77
    %87 = vmatmul.bf16.gmra.mxu0 %v71
    %v88 = vpop.f32.mrf.mxu0
    %v89 = vadd.f32 %v42, %v88
    %v90 = vpop.f32.mrf.mxu0
    %v91 = vadd.f32 %v47, %v90
    %92 = vmatmul.bf16.gmra.mxu0 %v74
    %v93 = vpop.f32.mrf.mxu0
    %v94 = vadd.f32 %v52, %v93
    %v95 = vpop.f32.mrf.mxu0
    %v96 = vadd.f32 %v57, %v95
    %97 = vdwg.mxu0
    %v98 = vmax.f32 %v89, 0.0
    %v99 = vmax.f32 %v91, 0.0
    %v100 = vmax.f32 %v94, 0.0
    %v101 = vmax.f32 %v96, 0.0
    %v102 = vld [vmem:[%s3] sm:$0xf]
    %v103 = vld [vmem:[%s3 + $0x4] sm:$0xf]
    %v104 = vld [vmem:[%s3 + $0x8] sm:$0xf]
    %v105 = vld [vmem:[%s3 + $0xc] sm:$0xf]
    %v106 = vpack.c.bf16 %v99, %v98
    %v107 = vpack.c.bf16 %v101, %v100
    %v108 = vld [vmem:[%s4] sm:$0xff]
    %v109 = vld [vmem:[%s4 + $0x8] sm:$0xff]
    %v110 = vld [vmem:[%s4 + $0x10] sm:$0xff]
    %v111 = vld [vmem:[%s4 + $0x18] sm:$0xff]
    %113 = vset.pattern.permute.xlu0 0
    %114 = vperm.xlu0 %113, %v108
    %v115 = vpop.permute.xlu0 %114
    %118 = vset.pattern.permute.xlu0 0
    %119 = vperm.xlu0 %118, %v109
    %v120 = vpop.permute.xlu0 %119
    %123 = vset.pattern.permute.xlu0 0
    %124 = vperm.xlu0 %123, %v110
    %v125 = vpop.permute.xlu0 %124
    %128 = vset.pattern.permute.xlu0 0
    %129 = vperm.xlu0 %128, %v111
    %v130 = vpop.permute.xlu0 %129
    %v136 = vunpack.c.l.b16 %v102
    %v137 = vunpack.c.l.b16 %v103
    %v138 = vunpack.c.l.b16 %v104
    %v139 = vunpack.c.l.b16 %v105
    %v140 = vpack.c.b16 %v137, %v136
    %v141 = vpack.c.b16 %v139, %v138
    %vm142 = vcmask 261120
    %v144 = vsel %vm142, %v140, 0
    %v147 = vsel %vm142, %v141, 0
    %149 = vmatpush.bf16.msra.mxu0 0
    %150 = vmatpush.bf16.msra.mxu0 0
    %151 = vmatpush.bf16.msra.mxu0 0
    %152 = vmatpush.bf16.msra.mxu0 0
    %153 = vmatpush.bf16.msra.mxu0 0
    %154 = vmatpush.bf16.msra.mxu0 0
    %155 = vmatpush.bf16.msra.mxu0 %v107
    %156 = vmatpush.bf16.msra.mxu0 %v106
    %157 = vmatmul.bf16.gmra.mxu0 %v144
    %v158 = vpop.f32.mrf.mxu0
    %v159 = vadd.f32 %v115, %v158
    %v160 = vpop.f32.mrf.mxu0
    %v161 = vadd.f32 %v120, %v160
    %162 = vmatmul.bf16.gmra.mxu0 %v147
    %v163 = vpop.f32.mrf.mxu0
    %v164 = vadd.f32 %v125, %v163
    %v165 = vpop.f32.mrf.mxu0
    %v166 = vadd.f32 %v130, %v165
    %167 = vdwg.mxu0
    %v168 = vmax.f32 %v159, 0.0
    %v169 = vmax.f32 %v161, 0.0
    %v170 = vmax.f32 %v164, 0.0
    %v171 = vmax.f32 %v166, 0.0
    %v172 = vld [vmem:[%s5] sm:$0xff]
    %v173 = vld [vmem:[%s5 + $0x8] sm:$0xff]
    %v174 = vld [vmem:[%s5 + $0x10] sm:$0xff]
    %v175 = vld [vmem:[%s5 + $0x18] sm:$0xff]
    %177 = vset.pattern.permute.xlu0 0
    %178 = vperm.xlu0 %177, %v172
    %v179 = vpop.permute.xlu0 %178
    %182 = vset.pattern.permute.xlu0 0
    %183 = vperm.xlu0 %182, %v173
    %v184 = vpop.permute.xlu0 %183
    %187 = vset.pattern.permute.xlu0 0
    %188 = vperm.xlu0 %187, %v174
    %v189 = vpop.permute.xlu0 %188
    %192 = vset.pattern.permute.xlu0 0
    %193 = vperm.xlu0 %192, %v175
    %v194 = vpop.permute.xlu0 %193
    %v196 = vmul.f32 %v168, %v179
    %v197 = vmul.f32 %v169, %v184
    %v198 = vmul.f32 %v170, %v189
    %v199 = vmul.f32 %v171, %v194
    %vm200 = vcmask 64512
    %v201 = vsel %vm200, %v196, 0.0
    %v202 = vsel %vm200, %v197, 0.0
    %v203 = vadd.f32 %v201, %v202
    %v204 = vsel %vm200, %v198, 0.0
    %v205 = vadd.f32 %v203, %v204
    %v206 = vsel %vm200, %v199, 0.0
    %v207 = vadd.f32 %v205, %v206
    %v208 = vrot.slane %v207, 4
    %v209 = vadd.f32 %v207, %v208
    %v210 = vrot.slane %v209, 2
    %v211 = vadd.f32 %v209, %v210
    %v212 = vrot.slane %v211, 1
    %v213 = vadd.f32 %v211, %v212
    %s214 = sld [smem:[#allocation2]]
    %v215 = vstv %s214
    %v216 = vadd.f32 %v213, %v215
    %vm217 = vcmask 57344
    %218 = vst.msk [vmem:[#allocation3] sm:$0x1] %vm217, %v216
    // Predicated region
    $region30: #{tpu_custom_call.1} parent=1 // pred_check
      _
    $region31: #{tpu_custom_call.1} parent=1 // pred_check_branch
      %220 = sbr.rel (0) target = $region33
    $region32: #{tpu_custom_call.1} parent=1 // pred_region
      %222 = vsyncadd [#allocation4], 0
      %s224 = sshll.u32 [#allocation3], 4
      %s225 = int_to_ptr.vmem [resolvable:$true] %s224
      %s226 = sshll.u32 %s7, 4
      %s227 = int_to_ptr.hbm [resolvable:$true] %s226
      %229 = dma.vmem_to_hbm [thread:$0]  %s225, 16, %s227, [#allocation4]
    $region33: #{tpu_custom_call.1} parent=1 // pred_fallthru
      _
    // Predicated region
    $region34: #{tpu_custom_call.1} parent=1 // pred_check
      _
    $region35: #{tpu_custom_call.1} parent=1 // pred_check_branch
      %231 = sbr.rel (0) target = $region37
    $region36: #{tpu_custom_call.1} parent=1 // pred_region
      %233 = dma.done [#allocation4], 16
    $region37: #{tpu_custom_call.1} parent=1 // pred_fallthru
      _
    %234 = vsyncpa [#allocation4], 1

</llo_original>
